<compile_context>
chip_gen: v7x
topology: tpu7x:2x2x1
jax: 0.10.0
libtpu: 0.0.40
codegen_flags: <defaults>
</compile_context>

<pallas_src>
import jax
import jax.numpy as jnp
from jax.experimental import pallas as pl
from jax.experimental.pallas import tpu as pltpu


def _round_up(a, m):
    return ((a + m - 1) // m) * m


def _normalizer_kernel(scale_ref, bias_ref, x_ref, o_ref):
    # Fused affine: o = x * scale + bias  (scale/bias broadcast over the tile).
    x = x_ref[...].astype(jnp.float32)
    o_ref[...] = x * scale_ref[...] + bias_ref[...]


def normalizer(x, mean, std, *, target_block_bytes=4 << 20, donate_input=False):
    """x: (B, 3, H, W) NCHW (float32 or uint8). mean/std: (3,) float32.

    Returns float32 (B, 3, H, W), normalizing batch 0 only (module semantics).
    """
    B, C, H, W = x.shape
    assert C == 3, "Normalizer assumes 3 channels (RGB)"

    mean = jnp.asarray(mean, jnp.float32)
    std = jnp.asarray(std, jnp.float32)

    R = B * C          # one (scale, bias) pair per (batch, channel)
    L = H * W          # flattened spatial axis

    # Per-(b, c) affine coefficients:
    #   batch 0 : scale = 1/(255*std[c]),  bias = -mean[c]/std[c]
    #   batch>0 : scale = 1/255,           bias = 0
    is_b0 = (jnp.arange(B) == 0)[:, None]                                    # (B, 1)
    scale = jnp.where(is_b0, (1.0 / (255.0 * std))[None, :], 1.0 / 255.0)    # (B, C)
    bias = jnp.where(is_b0, (-mean / std)[None, :], 0.0)                     # (B, C)

    in_itemsize = jnp.dtype(x.dtype).itemsize
    budget_itemsize = max(in_itemsize, 4)     # budget blocks by the f32 output
    cost = pl.CostEstimate(flops=2 * R * L, transcendentals=0,
                           bytes_accessed=R * L * (in_itemsize + 4))
    io_aliases = {2: 0} if (donate_input and x.dtype == jnp.float32) else {}
    cparams_kw = dict(vmem_limit_bytes=48 * 1024 * 1024)

    if L % 128 == 0:
        # ---- lane/sublane-dense 3D path: (R, nchunks, 128) ------------------
        nchunks = L // 128
        x3 = x.reshape(R, nchunks, 128)
        scale3 = scale.reshape(R, 1, 1).astype(jnp.float32)
        bias3 = bias.reshape(R, 1, 1).astype(jnp.float32)

        # Max chunk-rows per block for ~target_block_bytes, multiple of 8.
        s_max = max(8, (target_block_bytes // (128 * budget_itemsize)) // 8 * 8)
        num_j = pl.cdiv(nchunks, s_max)
        # Prefer an even total step count for v7x megacore balance.
        if (R * num_j) % 2 == 1 and nchunks >= 16:
            num_j += 1
        if num_j <= 1:
            s_tile = nchunks
        else:
            s_tile = min(nchunks, _round_up(pl.cdiv(nchunks, num_j), 8))
        num_j = pl.cdiv(nchunks, s_tile)
        grid = (R, num_j)

        out3 = pl.pallas_call(
            _normalizer_kernel,
            out_shape=jax.ShapeDtypeStruct((R, nchunks, 128), jnp.float32),
            grid=grid,
            in_specs=[
                pl.BlockSpec((1, 1, 1), lambda r, j: (r, 0, 0)),        # scale
                pl.BlockSpec((1, 1, 1), lambda r, j: (r, 0, 0)),        # bias
                pl.BlockSpec((1, s_tile, 128), lambda r, j: (r, j, 0)),  # x tile
            ],
            out_specs=pl.BlockSpec((1, s_tile, 128), lambda r, j: (r, j, 0)),
            compiler_params=pltpu.CompilerParams(
                dimension_semantics=("parallel", "parallel"), **cparams_kw),
            cost_estimate=cost,
            input_output_aliases=io_aliases,
        )(scale3, bias3, x3)
        return out3.reshape(B, C, H, W)

    # ---- fallback 2D path for L not divisible by 128 ------------------------
    x2 = x.reshape(R, L)
    scale2 = scale.reshape(R, 1).astype(jnp.float32)
    bias2 = bias.reshape(R, 1).astype(jnp.float32)

    max_tl = max(128, (target_block_bytes // (R * budget_itemsize)) // 128 * 128)
    tile_l = L if L <= max_tl else max_tl
    grid = (pl.cdiv(L, tile_l),)

    out2 = pl.pallas_call(
        _normalizer_kernel,
        out_shape=jax.ShapeDtypeStruct((R, L), jnp.float32),
        grid=grid,
        in_specs=[
            pl.BlockSpec((R, 1), lambda j: (0, 0)),         # scale (resident)
            pl.BlockSpec((R, 1), lambda j: (0, 0)),         # bias  (resident)
            pl.BlockSpec((R, tile_l), lambda j: (0, j)),    # x column tile
        ],
        out_specs=pl.BlockSpec((R, tile_l), lambda j: (0, j)),
        compiler_params=pltpu.CompilerParams(
            dimension_semantics=("parallel",), **cparams_kw),
        cost_estimate=cost,
        input_output_aliases=io_aliases,
    )(scale2, bias2, x2)
    return out2.reshape(B, C, H, W)


def normalizer_ref(x, mean, std):
    """Pure-JAX reference matching the PyTorch forward exactly."""
    t = x.astype(jnp.float32) / 255.0
    t0 = (t[0] - mean[:, None, None]) / std[:, None, None]
    return t.at[0].set(t0)


if __name__ == "__main__":
    key = jax.random.PRNGKey(0)
    mean = jnp.array([0.485, 0.456, 0.406], dtype=jnp.float32)
    std = jnp.array([0.229, 0.224, 0.225], dtype=jnp.float32)

    # Main test: lane-dense 3D path (H*W multiple of 128).
    B, C, H, W = 2, 3, 16, 16
    k1, k2 = jax.random.split(key)
    x = jax.random.uniform(k1, (B, C, H, W), dtype=jnp.float32,
                           minval=0.0, maxval=255.0)
    out = jax.block_until_ready(normalizer(x, mean, std))
    ref = normalizer_ref(x, mean, std)
    assert out.shape == (B, C, H, W)
    assert jnp.allclose(out, ref, atol=1e-5, rtol=1e-5), "3D-path mismatch vs reference"

    # Secondary test: fallback 2D path (H*W not a multiple of 128), B=1.
    B2, H2, W2 = 1, 10, 12
    x2 = jax.random.uniform(k2, (B2, C, H2, W2), dtype=jnp.float32,
                            minval=0.0, maxval=255.0)
    out2 = jax.block_until_ready(normalizer(x2, mean, std))
    ref2 = normalizer_ref(x2, mean, std)
    assert out2.shape == (B2, C, H2, W2)
    assert jnp.allclose(out2, ref2, atol=1e-5, rtol=1e-5), "2D-path mismatch vs reference"

    print("KERNEL_OK")
</pallas_src>

<mosaic_0001>
module attributes {stable_mosaic.version = 11 : i64} {
  func.func @_normalizer_kernel(%arg0: i32, %arg1: i32, %arg2: memref<1x1x1xf32, #tpu.memory_space<vmem>>, %arg3: memref<1x1x1xf32, #tpu.memory_space<vmem>>, %arg4: memref<1x2x128xf32, #tpu.memory_space<vmem>>, %arg5: memref<1x2x128xf32, #tpu.memory_space<vmem>>) attributes {dimension_semantics = [#tpu.dimension_semantics<parallel>, #tpu.dimension_semantics<parallel>], iteration_bounds = array<i64: 6, 1>, scalar_prefetch = 0 : i64, scratch_operands = 0 : i64, tpu.core_type = #tpu.core_type<tc>, window_params = [{transform_indices = @transform_0, window_bounds = array<i64: 1, 1, 1>}, {transform_indices = @transform_1, window_bounds = array<i64: 1, 1, 1>}, {transform_indices = @transform_2, window_bounds = array<i64: 1, 2, 128>}, {transform_indices = @transform_3, window_bounds = array<i64: 1, 2, 128>}]} {
    %c0 = arith.constant 0 : index
    %c0_0 = arith.constant 0 : index
    %c0_1 = arith.constant 0 : index
    %0 = vector.load %arg4[%c0, %c0_0, %c0_1] : memref<1x2x128xf32, #tpu.memory_space<vmem>>, vector<1x2x128xf32>
    %c0_2 = arith.constant 0 : index
    %c0_3 = arith.constant 0 : index
    %c0_4 = arith.constant 0 : index
    %1 = vector.load %arg2[%c0_2, %c0_3, %c0_4] : memref<1x1x1xf32, #tpu.memory_space<vmem>>, vector<1x1x1xf32>
    %2 = vector.broadcast %1 : vector<1x1x1xf32> to vector<1x2x128xf32>
    %3 = arith.mulf %0, %2 : vector<1x2x128xf32>
    %c0_5 = arith.constant 0 : index
    %c0_6 = arith.constant 0 : index
    %c0_7 = arith.constant 0 : index
    %4 = vector.load %arg3[%c0_5, %c0_6, %c0_7] : memref<1x1x1xf32, #tpu.memory_space<vmem>>, vector<1x1x1xf32>
    %5 = vector.broadcast %4 : vector<1x1x1xf32> to vector<1x2x128xf32>
    %6 = arith.addf %3, %5 : vector<1x2x128xf32>
    %c0_8 = arith.constant 0 : index
    %c0_9 = arith.constant 0 : index
    %c0_10 = arith.constant 0 : index
    %7 = vector.load %arg5[%c0_8, %c0_9, %c0_10] : memref<1x2x128xf32, #tpu.memory_space<vmem>>, vector<1x2x128xf32>
    tpu.vector_store %arg5[%c0_8, %c0_9, %c0_10], %6 {strides = array<i32>} : memref<1x2x128xf32, #tpu.memory_space<vmem>>, vector<1x2x128xf32>,
    return
  }
  func.func @transform_0(%arg0: i32, %arg1: i32) -> (i32, i32, i32) {
    %c0_i32 = arith.constant 0 : i32
    %c0_i32_0 = arith.constant 0 : i32
    %c0_i32_1 = arith.constant 0 : i32
    return %arg0, %c0_i32, %c0_i32_0 : i32, i32, i32
  }
  func.func @transform_1(%arg0: i32, %arg1: i32) -> (i32, i32, i32) {
    %c0_i32 = arith.constant 0 : i32
    %c0_i32_0 = arith.constant 0 : i32
    %c0_i32_1 = arith.constant 0 : i32
    return %arg0, %c0_i32, %c0_i32_0 : i32, i32, i32
  }
  func.func @transform_2(%arg0: i32, %arg1: i32) -> (i32, i32, i32) {
    %c0_i32 = arith.constant 0 : i32
    %c0_i32_0 = arith.constant 0 : i32
    return %arg0, %arg1, %c0_i32 : i32, i32, i32
  }
  func.func @transform_3(%arg0: i32, %arg1: i32) -> (i32, i32, i32) {
    %c0_i32 = arith.constant 0 : i32
    %c0_i32_0 = arith.constant 0 : i32
    return %arg0, %arg1, %c0_i32 : i32, i32, i32
  }
}

</mosaic_0001>

<llo_original>
// kernel: tpu_custom_call.1
$region0: #{tpu_custom_call.1}
  #allocation0 [shape = 'u32[]', space=smem, size = 0x4, offset = 0x4, fixed_abs, tag = 'smem constant byte address 0x4 - core index']
  #allocation1 [shape = 'u32[144,128]{1,0:T(1,128)}', space=vmem, size = 0x12000, scoped, tag = 'internal scratch']
  %s0 = inlined_call_operand.vmem [shape: f32[6,1,1], index: 0, kind: input, shape index: {}]
  %s1 = inlined_call_operand.vmem [shape: f32[6,1,1], index: 1, kind: input, shape index: {}]
  %s2 = inlined_call_operand.vmem [shape: f32[6,2,128], index: 2, kind: input, shape index: {}]
  %s3 = inlined_call_operand.hbm [shape: f32[6,2,128], index: 3, kind: output, shape index: {}]
  %s4 = sld [smem:[#allocation0]]
  $region45: #{tpu_custom_call.1} parent=0
    _
  %s6 = ssub.s32 1, %s4
  %s7 = scalar_select 0, %s6, %s4
  $region1: #{tpu_custom_call.1} parent=0
    #allocation2 [shape = 'u8[2048]{0}', space=vmem, size = 0x800, scoped, tag = 'output window, operand 0']
    #allocation3 [shape = 's32[2]{0}', space=sflag, size = 0x8, scoped, tag = 'scoped memory for tpu_custom_call.1']
    %8 = vsyncpa [#allocation3], 0
    %s9 = scalar_lea.sflag [#allocation3], 1
    %10 = vsyncpa %s9, 0
    loop: start=0, step=1, limit=8
    $region2: #{tpu_custom_call.1} parent=1 // loop_pre_header
      _
    $region3: #{tpu_custom_call.1} parent=1 // loop_header
      %s12 = sphi 0, %s16
      %p13 = scmp.ge.s32.totalorder %s12, 8
      %s19 = sphi 0, %s31
      %s20 = sphi 0, %s27
      %s21 = sphi 0, %s19
      %s22 = sphi 0, %s20
      %s23 = sphi 0, %s21
      %s24 = sphi 0, %s22
      %s34 = sphi 0, %s36
      %s37 = sphi 0, %s34
      %s38 = sphi 0, %s37
      %s54 = sphi 0, %s38
      %s60 = sphi 0, %s62
      %s63 = sphi 0, %s60
      %s64 = sphi 0, %s63
      %s80 = sphi 0, %s64
      %s88 = sphi 0, %s90
      %s91 = sphi 0, %s88
      %s92 = sphi 0, %s91
      %s108 = sphi 0, %s92
      %s116 = sphi 0, %s118
      %s119 = sphi 0, %s116
      %s120 = sphi 0, %s119
      %s136 = sphi 0, %s120
    $region4: #{tpu_custom_call.1} parent=1 // loop_header_branch
      %15 = sbr.rel (%p13) target = $region8
    $region5: #{tpu_custom_call.1} parent=1 // loop_body
      %s17 = ssub.s32 %s12, 1
      %s18 = ssub.s32 %s12, 2
      %s25 = sadd.s32 1, %s20
      %p26 = scmp.ge.s32.totalorder %s25, 1
      %s27 = scalar_select %p26, 0, %s25
      %s28 = sadd.s32 1, %s19
      %s29 = scalar_select %p26, %s28, %s19
      %p30 = scmp.ge.s32.totalorder %s29, 6
      %s31 = scalar_select %p30, 0, %s29
      %s32 = ssub.s32 %s19, %s31
      %p33 = scmp.eq.s32.totalorder %s32, 0
      %s35 = sadd.s32 %s34, 1
      %s36 = scalar_select %p33, %s34, %s35
      %p39 = pneg %p33
      %p40 = scmp.eq.s32.totalorder %s12, 5
      %p41 = por %p39, %p40
      %p42 = scmp.ne.s32.totalorder %s34, %s37
      %p43 = scmp.eq.s32.totalorder %s12, 0
      %p44 = por %p42, %p43
      %p45 = scmp.ne.s32.totalorder %s34, %s37
      %p46 = scmp.eq.s32.totalorder %s17, 5
      %p47 = por %p45, %p46
      %p48 = scmp.ne.s32.totalorder %s37, %s38
      %p49 = scmp.eq.s32.totalorder %s17, 0
      %p50 = por %p48, %p49
      %p51 = scmp.ne.s32.totalorder %s37, %s38
      %p52 = scmp.eq.s32.totalorder %s18, 5
      %p53 = por %p51, %p52
      %p55 = scmp.ne.s32.totalorder %s38, %s54
      %p56 = scmp.eq.s32.totalorder %s18, 0
      %p57 = por %p55, %p56
      %s58 = ssub.s32 %s19, %s31
      %p59 = scmp.eq.s32.totalorder %s58, 0
      %s61 = sadd.s32 %s60, 1
      %s62 = scalar_select %p59, %s60, %s61
      %p65 = pneg %p59
      %p66 = scmp.eq.s32.totalorder %s12, 5
      %p67 = por %p65, %p66
      %p68 = scmp.ne.s32.totalorder %s60, %s63
      %p69 = scmp.eq.s32.totalorder %s12, 0
      %p70 = por %p68, %p69
      %p71 = scmp.ne.s32.totalorder %s60, %s63
      %p72 = scmp.eq.s32.totalorder %s17, 5
      %p73 = por %p71, %p72
      %p74 = scmp.ne.s32.totalorder %s63, %s64
      %p75 = scmp.eq.s32.totalorder %s17, 0
      %p76 = por %p74, %p75
      %p77 = scmp.ne.s32.totalorder %s63, %s64
      %p78 = scmp.eq.s32.totalorder %s18, 5
      %p79 = por %p77, %p78
      %p81 = scmp.ne.s32.totalorder %s64, %s80
      %p82 = scmp.eq.s32.totalorder %s18, 0
      %p83 = por %p81, %p82
      %s84 = ssub.s32 %s19, %s31
      %s85 = ssub.s32 %s20, %s27
      %s86 = sor.u32 %s84, %s85
      %p87 = scmp.eq.s32.totalorder %s86, 0
      %s89 = sadd.s32 %s88, 1
      %s90 = scalar_select %p87, %s88, %s89
      %p93 = pneg %p87
      %p94 = scmp.eq.s32.totalorder %s12, 5
      %p95 = por %p93, %p94
      %p96 = scmp.ne.s32.totalorder %s88, %s91
      %p97 = scmp.eq.s32.totalorder %s12, 0
      %p98 = por %p96, %p97
      %p99 = scmp.ne.s32.totalorder %s88, %s91
      %p100 = scmp.eq.s32.totalorder %s17, 5
      %p101 = por %p99, %p100
      %p102 = scmp.ne.s32.totalorder %s91, %s92
      %p103 = scmp.eq.s32.totalorder %s17, 0
      %p104 = por %p102, %p103
      %p105 = scmp.ne.s32.totalorder %s91, %s92
      %p106 = scmp.eq.s32.totalorder %s18, 5
      %p107 = por %p105, %p106
      %p109 = scmp.ne.s32.totalorder %s92, %s108
      %p110 = scmp.eq.s32.totalorder %s18, 0
      %p111 = por %p109, %p110
      %s112 = ssub.s32 %s19, %s31
      %s113 = ssub.s32 %s20, %s27
      %s114 = sor.u32 %s112, %s113
      %p115 = scmp.eq.s32.totalorder %s114, 0
      %s117 = sadd.s32 %s116, 1
      %s118 = scalar_select %p115, %s116, %s117
      %p121 = pneg %p115
      %p122 = scmp.eq.s32.totalorder %s12, 5
      %p123 = por %p121, %p122
      %p124 = scmp.ne.s32.totalorder %s116, %s119
      %p125 = scmp.eq.s32.totalorder %s12, 0
      %p126 = por %p124, %p125
      %p127 = scmp.ne.s32.totalorder %s116, %s119
      %p128 = scmp.eq.s32.totalorder %s17, 5
      %p129 = por %p127, %p128
      %p130 = scmp.ne.s32.totalorder %s119, %s120
      %p131 = scmp.eq.s32.totalorder %s17, 0
      %p132 = por %p130, %p131
      %p133 = scmp.ne.s32.totalorder %s119, %s120
      %p134 = scmp.eq.s32.totalorder %s18, 5
      %p135 = por %p133, %p134
      %p137 = scmp.ne.s32.totalorder %s120, %s136
      %p138 = scmp.eq.s32.totalorder %s18, 0
      %p139 = por %p137, %p138
      %p140 = scmp.le.s32.totalorder 1, %s12
      %p141 = scmp.lt.s32.totalorder %s12, 7
      %p142 = pnand %p140, %p141
      %p143 = pneg %p142
      // Predicated region
      $region9: #{tpu_custom_call.1} parent=5 // pred_check
        _
      $region10: #{tpu_custom_call.1} parent=5 // pred_check_branch
        %145 = sbr.rel (%p142) target = $region12
      $region11: #{tpu_custom_call.1} parent=5 // pred_region
        %s146 = ssub.s32 %s12, 1
      $region12: #{tpu_custom_call.1} parent=5 // pred_fallthru
        _
      %p147 = scmp.lt.s32.totalorder %s12, 6
      // Predicated region
      $region13: #{tpu_custom_call.1} parent=5 // pred_check
        %p148 = pneg %p147
      $region14: #{tpu_custom_call.1} parent=5 // pred_check_branch
        %150 = sbr.rel (%p148) target = $region16
      $region15: #{tpu_custom_call.1} parent=5 // pred_region
        // Predicated region
        $region17: #{tpu_custom_call.1} parent=15 // pred_check
          %p151 = pneg %p44
        $region18: #{tpu_custom_call.1} parent=15 // pred_check_branch
          %153 = sbr.rel (%p151) target = $region20
        $region19: #{tpu_custom_call.1} parent=15 // pred_region
          %p154 = scmp.lt.s32.totalorder %s19, 5
          %s155 = scalar_select %p154, %s19, 5
          %s156 = scalar_lea.vmem %s0, %s155
        $region20: #{tpu_custom_call.1} parent=15 // pred_fallthru
          _
        // Predicated region
        $region21: #{tpu_custom_call.1} parent=15 // pred_check
          %p157 = pneg %p70
        $region22: #{tpu_custom_call.1} parent=15 // pred_check_branch
          %159 = sbr.rel (%p157) target = $region24
        $region23: #{tpu_custom_call.1} parent=15 // pred_region
          %p160 = scmp.lt.s32.totalorder %s19, 5
          %s161 = scalar_select %p160, %s19, 5
          %s162 = scalar_lea.vmem %s1, %s161
        $region24: #{tpu_custom_call.1} parent=15 // pred_fallthru
          _
        // Predicated region
        $region25: #{tpu_custom_call.1} parent=15 // pred_check
          %p163 = pneg %p98
        $region26: #{tpu_custom_call.1} parent=15 // pred_check_branch
          %165 = sbr.rel (%p163) target = $region28
        $region27: #{tpu_custom_call.1} parent=15 // pred_region
          %p166 = scmp.lt.s32.totalorder %s19, 5
          %s167 = scalar_select %p166, %s19, 5
          %p168 = scmp.lt.s32.totalorder %s20, 0
          %s169 = scalar_select %p168, %s20, 0
          %s170 = sadd.s32 %s169, %s167
          %s171 = smul.addr %s170, 2
          %s172 = scalar_lea.vmem %s2, %s171
        $region28: #{tpu_custom_call.1} parent=15 // pred_fallthru
          _
      $region16: #{tpu_custom_call.1} parent=5 // pred_fallthru
        _
      %p173 = scmp.le.s32.totalorder 1, %s12
      %p174 = scmp.lt.s32.totalorder %s12, 7
      %p175 = pnand %p173, %p174
      %p176 = pneg %p175
      // Predicated region
      $region29: #{tpu_custom_call.1} parent=5 // pred_check
        _
      $region30: #{tpu_custom_call.1} parent=5 // pred_check_branch
        %178 = sbr.rel (%p175) target = $region32
      $region31: #{tpu_custom_call.1} parent=5 // pred_region
        %s179 = ssub.s32 %s12, 1
        %p180 = scmp.lt.s32.totalorder %s21, 5
        %s181 = scalar_select %p180, %s21, 5
        %s182 = scalar_lea.vmem %s0, %s181
        %p183 = pneg %p50
        %p184 = pneg %p47
        %p185 = scmp.lt.s32.totalorder %s21, 5
        %s186 = scalar_select %p185, %s21, 5
        %s187 = scalar_lea.vmem %s1, %s186
        %p188 = pneg %p76
        %p189 = pneg %p73
        %p190 = scmp.lt.s32.totalorder %s21, 5
        %s191 = scalar_select %p190, %s21, 5
        %p192 = scmp.lt.s32.totalorder %s22, 0
        %s193 = scalar_select %p192, %s22, 0
        %s194 = sadd.s32 %s193, %s191
        %s195 = smul.addr %s194, 2
        %s196 = scalar_lea.vmem %s2, %s195
        %p197 = pneg %p104
        %p198 = pneg %p101
        %p199 = pneg %p132
        %p200 = pneg %p129
        %s201 = sand.u32 %s119, 1
        %s202 = scalar_lea.sflag [#allocation3], %s201
        %s203 = sand.u32 %s119, 1
        %s204 = smul.addr %s203, 2
        %s205 = scalar_lea.vmem [#allocation2], %s204
        %p206 = scmp.lt.s32.totalorder %s21, 5
        %s207 = scalar_select %p206, %s21, 5
        %s208 = scalar_lea.vmem %s0, %s207
        %p209 = scmp.lt.s32.totalorder %s21, 5
        %s210 = scalar_select %p209, %s21, 5
        %s211 = scalar_lea.vmem %s1, %s210
        %p212 = scmp.lt.s32.totalorder %s21, 5
        %s213 = scalar_select %p212, %s21, 5
        %p214 = scmp.lt.s32.totalorder %s22, 0
        %s215 = scalar_select %p214, %s22, 0
        %s216 = sadd.s32 %s215, %s213
        %s217 = smul.addr %s216, 2
        %s218 = scalar_lea.vmem %s2, %s217
        %v219 = vld [vmem:[%s218] sm:$0x3]
        %v220 = vld [vmem:[%s208] sm:$0x1]
        %v222 = vlaneseq
        %v223 = vshrl.u32 %v222, 7
        %v224 = vsub.s32 0, %v223
        %v225 = vrot.slane %v220, %v224
        %226 = vset.pattern.permute.xlu0 0
        %227 = vperm.xlu0 %226, %v225
        %v228 = vpop.permute.xlu0 %227
        %v230 = vmul.f32 %v219, %v228
        %v231 = vld [vmem:[%s211] sm:$0x1]
        %v233 = vlaneseq
        %v234 = vshrl.u32 %v233, 7
        %v235 = vsub.s32 0, %v234
        %v236 = vrot.slane %v231, %v235
        %237 = vset.pattern.permute.xlu0 0
        %238 = vperm.xlu0 %237, %v236
        %v239 = vpop.permute.xlu0 %238
        %v241 = vadd.f32 %v230, %v239
        %242 = vst [vmem:[%s205] sm:$0x3] %v241
        %s243 = sand.u32 %s119, 1
        %s244 = scalar_lea.sflag [#allocation3], %s243
        %s245 = sand.u32 %s119, 1
        %s246 = smul.addr %s245, 2
        %s247 = scalar_lea.vmem [#allocation2], %s246
        // Predicated region
        $region33: #{tpu_custom_call.1} parent=31 // pred_check
          %p248 = pneg %p129
        $region34: #{tpu_custom_call.1} parent=31 // pred_check_branch
          %250 = sbr.rel (%p248) target = $region36
        $region35: #{tpu_custom_call.1} parent=31 // pred_region
          %s252 = ssub.s32 32, 32
          %253 = vsyncadd %s244, %s252
          %s254 = sadd.s32 %s22, %s21
          %s255 = smul.addr %s254, 32
          %s256 = scalar_lea.hbm %s3, %s255
          %s258 = sshll.u32 %s247, 4
          %s259 = int_to_ptr.vmem [resolvable:$true] %s258
          %261 = dma.vmem_to_hbm [thread:$0]  %s259, 32, %s256, %s244
        $region36: #{tpu_custom_call.1} parent=31 // pred_fallthru
          _
      $region32: #{tpu_custom_call.1} parent=5 // pred_fallthru
        _
      %p262 = scmp.le.s32.totalorder 2, %s12
      // Predicated region
      $region37: #{tpu_custom_call.1} parent=5 // pred_check
        %p263 = pneg %p262
      $region38: #{tpu_custom_call.1} parent=5 // pred_check_branch
        %265 = sbr.rel (%p263) target = $region40
      $region39: #{tpu_custom_call.1} parent=5 // pred_region
        %s266 = ssub.s32 %s12, 2
        // Predicated region
        $region41: #{tpu_custom_call.1} parent=39 // pred_check
          %p267 = pneg %p135
        $region42: #{tpu_custom_call.1} parent=39 // pred_check_branch
          %269 = sbr.rel (%p267) target = $region44
        $region43: #{tpu_custom_call.1} parent=39 // pred_region
          %s270 = sand.u32 %s120, 1
          %s271 = scalar_lea.sflag [#allocation3], %s270
          %s272 = sand.u32 %s120, 1
          %s273 = smul.addr %s272, 2
          %s274 = scalar_lea.vmem [#allocation2], %s273
          %275 = dma.done %s271, 32
        $region44: #{tpu_custom_call.1} parent=39 // pred_fallthru
          _
      $region40: #{tpu_custom_call.1} parent=5 // pred_fallthru
        _
    $region6: #{tpu_custom_call.1} parent=1 // loop_footer
      %s16 = sadd.s32 1, %s12
    $region7: #{tpu_custom_call.1} parent=1 // loop_footer_branch
      %11 = sbr.rel target = $region3
    $region8: #{tpu_custom_call.1} parent=1 // loop_exit
      _
    %276 = vsyncpa [#allocation3], 1
    %s277 = scalar_lea.sflag [#allocation3], 1
    %278 = vsyncpa %s277, 1

</llo_original>
